<compile_context>
chip_gen: v7x
topology: tpu7x:2x2x1
jax: 0.10.0
libtpu: 0.0.40
codegen_flags: <defaults>
</compile_context>

<pallas_src>
import functools

import jax
import jax.numpy as jnp
import numpy as np
from jax.experimental import pallas as pl
from jax.experimental.pallas import tpu as pltpu


def _psconv_kernel(x_ref, w_ref, o_ref, *, W, C, P, tH, dils):
    """One grid step = tH output rows of one batch element.

    x_ref: [Hp, Wp, C]            full zero-padded NHWC image (resident per n)
    w_ref: [len(dils)*9*C, Cop]   stacked dense per-tap weights (lane-dense)
    o_ref: [tH, W, Cop]           lane-dense output tile (Cop % 128 == 0)
    """
    Cop = o_ref.shape[-1]
    R = tH * W
    row0 = pl.multiple_of(pl.program_id(1) * tH, tH)

    # One slab load per step: every tap of every dilation group reads from
    # padded rows [row0, row0 + tH + 2P).
    xs = x_ref[pl.ds(row0, tH + 2 * P), :, :]          # (tH+2P, Wp, C)
    w = w_ref[...]                                      # resident weights

    acc = None
    t0 = 0
    for dil in dils:                      # one im2col matmul per dilation group
        off = P - dil                     # every conv here has padding == dilation
        cols = []
        for kh in range(3):
            for kw in range(3):
                sl = xs[off + kh * dil: off + kh * dil + tH,
                        off + kw * dil: off + kw * dil + W, :]
                cols.append(sl.reshape(R, C))
        patches = jnp.concatenate(cols, axis=-1)        # (R, 9*C)
        contrib = jnp.dot(patches, w[t0: t0 + 9 * C, :],
                          preferred_element_type=jnp.float32)
        acc = contrib if acc is None else acc + contrib
        t0 += 9 * C

    o_ref[...] = acc.reshape(tH, W, Cop).astype(o_ref.dtype)


def _grouped_to_dense(w, parts):
    """PyTorch grouped-conv weight [Co, Ci/parts, K, K] -> dense [K, K, Ci, Co]."""
    Co, Cig, K, _ = w.shape
    Cog = Co // parts
    dense = jnp.zeros((K, K, Cig * parts, Co), w.dtype)
    for g in range(parts):
        blk = jnp.transpose(w[g * Cog:(g + 1) * Cog], (2, 3, 1, 0))  # [K,K,Cig,Cog]
        dense = dense.at[:, :, g * Cig:(g + 1) * Cig,
                               g * Cog:(g + 1) * Cog].set(blk)
    return dense


def _choose_tile_h(N, H, W, C, n_groups, itemsize,
                   target_steps=8, max_patch_bytes=2 << 20):
    """Largest H-tile (divisor of H) that gives >= target grid steps and keeps
    the per-step im2col footprint small."""
    best_key, best_t = None, H
    for t in range(H, 0, -1):
        if H % t:
            continue
        patch_bytes = t * W * 9 * C * n_groups * itemsize
        if patch_bytes > max_patch_bytes and t != 1:
            continue
        steps = N * (H // t)
        key = (min(steps, target_steps), t)
        if best_key is None or key > best_key:
            best_key, best_t = key, t
    return best_t


def _vmem_limit_bytes():
    try:
        cap = int(pltpu.get_tpu_info().vmem_capacity_bytes)
    except Exception:
        cap = 64 << 20                      # v7x physical per-core floor
    return min(cap // 2, 64 << 20)


@functools.partial(jax.jit, static_argnames=("parts", "dilation", "compute_dtype"))
def psconv2d_pallas(x_nchw, w_gw, w_shift, w_conv, *, parts=4, dilation=1,
                    compute_dtype=jnp.bfloat16):
    N, Ci, H, W = x_nchw.shape
    Co = w_conv.shape[0]
    d = dilation
    P = 2 * d                                            # max halo (gwconv_shift)

    # ---- fold the three convs into stacked dense per-dilation weights -------
    w_conv_d = jnp.transpose(w_conv, (2, 3, 1, 0)).astype(jnp.float32)  # [3,3,Ci,Co]
    w_gw_d = _grouped_to_dense(w_gw.astype(jnp.float32), parts)
    # x.chunk(2,1) -> cat(x2,x1) is a channel rotation by Ci//2; fold it into
    # the shift conv's input-channel axis instead of permuting activations.
    w_sh_d = jnp.roll(_grouped_to_dense(w_shift.astype(jnp.float32), parts),
                      -(Ci // 2), axis=2)
    if d == 1:
        groups = [(1, w_conv_d + w_gw_d), (2 * d, w_sh_d)]  # conv & gwconv coincide
    else:
        groups = [(1, w_conv_d), (d, w_gw_d), (2 * d, w_sh_d)]
    dils = tuple(g[0] for g in groups)

    # Lane-dense output / weight tile: pad output channels to a multiple of 128.
    Cop = -(-Co // 128) * 128
    w_big = jnp.concatenate([wd.reshape(9 * Ci, Co) for _, wd in groups], axis=0)
    w_big = jnp.pad(w_big, ((0, 0), (0, Cop - Co))).astype(compute_dtype)

    # ---- NCHW -> NHWC, pad once with the maximum halo, MXU input dtype -------
    x = jnp.transpose(x_nchw, (0, 2, 3, 1)).astype(compute_dtype)
    x_pad = jnp.pad(x, ((0, 0), (P, P), (P, P), (0, 0)))
    Hp, Wp = H + 2 * P, W + 2 * P

    tH = _choose_tile_h(N, H, W, Ci, len(dils), jnp.dtype(compute_dtype).itemsize)
    grid = (N, H // tH)                                  # 8 steps for the demo shape

    kernel = functools.partial(_psconv_kernel, W=W, C=Ci, P=P, tH=tH, dils=dils)
    out = pl.pallas_call(
        kernel,
        out_shape=jax.ShapeDtypeStruct((N, H, W, Cop), jnp.float32),
        grid=grid,
        in_specs=[
            # Full padded image of batch n; index_map ignores h -> DMA'd once
            # per batch element and kept resident across its H-tiles.
            pl.BlockSpec((None, Hp, Wp, Ci), lambda n, h: (n, 0, 0, 0)),
            # Stacked weights, resident for the whole grid (lane-dense tile).
            pl.BlockSpec(w_big.shape, lambda n, h: (0, 0)),
        ],
        out_specs=pl.BlockSpec((None, tH, W, Cop), lambda n, h: (n, h, 0, 0)),
        compiler_params=pltpu.CompilerParams(
            dimension_semantics=("parallel", "parallel"),
            vmem_limit_bytes=_vmem_limit_bytes()),
    )(x_pad, w_big)

    # Drop the channel padding, back to NCHW (fuses with surrounding XLA).
    return jnp.transpose(out[..., :Co], (0, 3, 1, 2))


def psconv2d_ref(x, w_gw, w_shift, w_conv, *, parts=4, dilation=1):
    """Pure-JAX reference of the PyTorch forward."""
    C = x.shape[1]
    dn = ("NCHW", "OIHW", "NCHW")
    d = dilation
    x1, x2 = x[:, :C // 2], x[:, C // 2:]
    x_cat = jnp.concatenate([x2, x1], axis=1)
    y_gw = jax.lax.conv_general_dilated(
        x, w_gw, (1, 1), [(d, d), (d, d)], rhs_dilation=(d, d),
        feature_group_count=parts, dimension_numbers=dn)
    y_sh = jax.lax.conv_general_dilated(
        x_cat, w_shift, (1, 1), [(2 * d, 2 * d), (2 * d, 2 * d)],
        rhs_dilation=(2 * d, 2 * d), feature_group_count=parts,
        dimension_numbers=dn)
    y_c = jax.lax.conv_general_dilated(
        x, w_conv, (1, 1), [(1, 1), (1, 1)], dimension_numbers=dn)
    return y_gw + y_c + y_sh


if __name__ == "__main__":
    # PSConv2d(in=16, out=16, kernel_size=3, stride=1, padding=1, dilation=1,
    #          parts=4, bias=False) on a 2x16x16x16 input.
    N, C, H, W = 2, 16, 16, 16
    parts, dilation = 4, 1
    cig = C // parts

    key = jax.random.PRNGKey(0)
    k1, k2, k3, kx = jax.random.split(key, 4)
    w_gw = 0.1 * jax.random.normal(k1, (C, cig, 3, 3), jnp.float32)
    w_shift = 0.1 * jax.random.normal(k2, (C, cig, 3, 3), jnp.float32)
    w_conv = 0.1 * jax.random.normal(k3, (C, C, 3, 3), jnp.float32)

    # Replicate PSConv2d.__init__: zero conv weights on the (shifted) block
    # diagonal covered by the grouped convs.
    mask = np.zeros((C, C, 3, 3), dtype=bool)
    ocp = icp = C // parts
    for i in range(parts):
        j = (i + parts // 2) % parts
        mask[i * ocp:(i + 1) * ocp, i * icp:(i + 1) * icp] = True
        mask[j * ocp:(j + 1) * ocp, i * icp:(i + 1) * icp] = True
    w_conv = jnp.where(jnp.asarray(mask), 0.0, w_conv)

    x = jax.random.normal(kx, (N, C, H, W), jnp.float32)

    ref = psconv2d_ref(x, w_gw, w_shift, w_conv, parts=parts, dilation=dilation)

    # f32 MXU path: tight check against the lax.conv reference.
    out_f32 = jax.block_until_ready(
        psconv2d_pallas(x, w_gw, w_shift, w_conv, parts=parts,
                        dilation=dilation, compute_dtype=jnp.float32))
    np.testing.assert_allclose(np.asarray(out_f32), np.asarray(ref),
                               rtol=5e-4, atol=5e-4)

    # bf16 MXU path (halved HBM/VMEM traffic, 2x MXU throughput on v6e/v7x):
    # compare against a reference fed with bf16-quantized inputs/weights, so
    # only f32 accumulation order differs.
    out_bf16 = jax.block_until_ready(
        psconv2d_pallas(x, w_gw, w_shift, w_conv, parts=parts,
                        dilation=dilation, compute_dtype=jnp.bfloat16))
    q = lambda a: a.astype(jnp.bfloat16).astype(jnp.float32)
    ref_q = psconv2d_ref(q(x), q(w_gw), q(w_shift), q(w_conv),
                         parts=parts, dilation=dilation)
    np.testing.assert_allclose(np.asarray(out_bf16), np.asarray(ref_q),
                               rtol=5e-3, atol=5e-3)

    print("KERNEL_OK")
</pallas_src>

<mosaic_0001>
module attributes {stable_mosaic.version = 11 : i64} {
  func.func @_psconv_kernel(%arg0: i32, %arg1: i32, %arg2: memref<1x20x20x16xf32, #tpu.memory_space<vmem>>, %arg3: memref<288x128xf32, #tpu.memory_space<vmem>>, %arg4: memref<1x4x16x128xf32, #tpu.memory_space<vmem>>) attributes {dimension_semantics = [#tpu.dimension_semantics<parallel>, #tpu.dimension_semantics<parallel>], iteration_bounds = array<i64: 2, 4>, scalar_prefetch = 0 : i64, scratch_operands = 0 : i64, tpu.core_type = #tpu.core_type<tc>, window_params = [{transform_indices = @transform_0, window_bounds = array<i64: 1, 20, 20, 16>}, {pipeline_mode = #tpu.pipeline_mode<synchronous>, transform_indices = @transform_1, window_bounds = array<i64: 288, 128>}, {transform_indices = @transform_2, window_bounds = array<i64: 1, 4, 16, 128>}]} {
    %c4_i32 = arith.constant 4 : i32
    %0 = arith.muli %arg1, %c4_i32 : i32
    %1 = tpu.assume_multiple %0, 4 : i32
    %c0 = arith.constant 0 : index
    %2 = arith.index_cast %1 : i32 to index
    %c0_0 = arith.constant 0 : index
    %c0_1 = arith.constant 0 : index
    %3 = vector.load %arg2[%c0, %2, %c0_0, %c0_1] : memref<1x20x20x16xf32, #tpu.memory_space<vmem>>, vector<1x8x20x16xf32>
    %4 = vector.shape_cast %3 : vector<1x8x20x16xf32> to vector<8x20x16xf32>
    %c0_2 = arith.constant 0 : index
    %c0_3 = arith.constant 0 : index
    %5 = vector.load %arg3[%c0_2, %c0_3] : memref<288x128xf32, #tpu.memory_space<vmem>>, vector<288x128xf32>
    %6 = vector.extract_strided_slice %4 {offsets = [1, 1, 0], sizes = [4, 16, 16], strides = [1, 1, 1]} : vector<8x20x16xf32> to vector<4x16x16xf32>
    %7 = vector.shape_cast %6 : vector<4x16x16xf32> to vector<64x16xf32>
    %8 = vector.extract_strided_slice %4 {offsets = [1, 2, 0], sizes = [4, 16, 16], strides = [1, 1, 1]} : vector<8x20x16xf32> to vector<4x16x16xf32>
    %9 = vector.shape_cast %8 : vector<4x16x16xf32> to vector<64x16xf32>
    %10 = vector.extract_strided_slice %4 {offsets = [1, 3, 0], sizes = [4, 16, 16], strides = [1, 1, 1]} : vector<8x20x16xf32> to vector<4x16x16xf32>
    %11 = vector.shape_cast %10 : vector<4x16x16xf32> to vector<64x16xf32>
    %12 = vector.extract_strided_slice %4 {offsets = [2, 1, 0], sizes = [4, 16, 16], strides = [1, 1, 1]} : vector<8x20x16xf32> to vector<4x16x16xf32>
    %13 = vector.shape_cast %12 : vector<4x16x16xf32> to vector<64x16xf32>
    %14 = vector.extract_strided_slice %4 {offsets = [2, 2, 0], sizes = [4, 16, 16], strides = [1, 1, 1]} : vector<8x20x16xf32> to vector<4x16x16xf32>
    %15 = vector.shape_cast %14 : vector<4x16x16xf32> to vector<64x16xf32>
    %16 = vector.extract_strided_slice %4 {offsets = [2, 3, 0], sizes = [4, 16, 16], strides = [1, 1, 1]} : vector<8x20x16xf32> to vector<4x16x16xf32>
    %17 = vector.shape_cast %16 : vector<4x16x16xf32> to vector<64x16xf32>
    %18 = vector.extract_strided_slice %4 {offsets = [3, 1, 0], sizes = [4, 16, 16], strides = [1, 1, 1]} : vector<8x20x16xf32> to vector<4x16x16xf32>
    %19 = vector.shape_cast %18 : vector<4x16x16xf32> to vector<64x16xf32>
    %20 = vector.extract_strided_slice %4 {offsets = [3, 2, 0], sizes = [4, 16, 16], strides = [1, 1, 1]} : vector<8x20x16xf32> to vector<4x16x16xf32>
    %21 = vector.shape_cast %20 : vector<4x16x16xf32> to vector<64x16xf32>
    %22 = vector.extract_strided_slice %4 {offsets = [3, 3, 0], sizes = [4, 16, 16], strides = [1, 1, 1]} : vector<8x20x16xf32> to vector<4x16x16xf32>
    %23 = vector.shape_cast %22 : vector<4x16x16xf32> to vector<64x16xf32>
    %24 = tpu.concatenate %7, %9, %11, %13, %15, %17, %19, %21, %23 in 1 : vector<64x16xf32>, vector<64x16xf32>, vector<64x16xf32>, vector<64x16xf32>, vector<64x16xf32>, vector<64x16xf32>, vector<64x16xf32>, vector<64x16xf32>, vector<64x16xf32> -> vector<64x144xf32>
    %25 = vector.extract_strided_slice %5 {offsets = [0, 0], sizes = [144, 128], strides = [1, 1]} : vector<288x128xf32> to vector<144x128xf32>
    %cst = arith.constant dense<0.000000e+00> : vector<64x128xf32>
    %26 = tpu.matmul %24, %25, %cst {dimension_numbers = #tpu.dot_dimension_numbers<[1], [0], [0], [1], [0, 0, 1, 1], [], []>} : vector<64x144xf32>, vector<144x128xf32>, vector<64x128xf32> -> vector<64x128xf32>
    %27 = vector.extract_strided_slice %4 {offsets = [0, 0, 0], sizes = [4, 16, 16], strides = [1, 1, 1]} : vector<8x20x16xf32> to vector<4x16x16xf32>
    %28 = vector.shape_cast %27 : vector<4x16x16xf32> to vector<64x16xf32>
    %29 = vector.extract_strided_slice %4 {offsets = [0, 2, 0], sizes = [4, 16, 16], strides = [1, 1, 1]} : vector<8x20x16xf32> to vector<4x16x16xf32>
    %30 = vector.shape_cast %29 : vector<4x16x16xf32> to vector<64x16xf32>
    %31 = vector.extract_strided_slice %4 {offsets = [0, 4, 0], sizes = [4, 16, 16], strides = [1, 1, 1]} : vector<8x20x16xf32> to vector<4x16x16xf32>
    %32 = vector.shape_cast %31 : vector<4x16x16xf32> to vector<64x16xf32>
    %33 = vector.extract_strided_slice %4 {offsets = [2, 0, 0], sizes = [4, 16, 16], strides = [1, 1, 1]} : vector<8x20x16xf32> to vector<4x16x16xf32>
    %34 = vector.shape_cast %33 : vector<4x16x16xf32> to vector<64x16xf32>
    %35 = vector.extract_strided_slice %4 {offsets = [2, 2, 0], sizes = [4, 16, 16], strides = [1, 1, 1]} : vector<8x20x16xf32> to vector<4x16x16xf32>
    %36 = vector.shape_cast %35 : vector<4x16x16xf32> to vector<64x16xf32>
    %37 = vector.extract_strided_slice %4 {offsets = [2, 4, 0], sizes = [4, 16, 16], strides = [1, 1, 1]} : vector<8x20x16xf32> to vector<4x16x16xf32>
    %38 = vector.shape_cast %37 : vector<4x16x16xf32> to vector<64x16xf32>
    %39 = vector.extract_strided_slice %4 {offsets = [4, 0, 0], sizes = [4, 16, 16], strides = [1, 1, 1]} : vector<8x20x16xf32> to vector<4x16x16xf32>
    %40 = vector.shape_cast %39 : vector<4x16x16xf32> to vector<64x16xf32>
    %41 = vector.extract_strided_slice %4 {offsets = [4, 2, 0], sizes = [4, 16, 16], strides = [1, 1, 1]} : vector<8x20x16xf32> to vector<4x16x16xf32>
    %42 = vector.shape_cast %41 : vector<4x16x16xf32> to vector<64x16xf32>
    %43 = vector.extract_strided_slice %4 {offsets = [4, 4, 0], sizes = [4, 16, 16], strides = [1, 1, 1]} : vector<8x20x16xf32> to vector<4x16x16xf32>
    %44 = vector.shape_cast %43 : vector<4x16x16xf32> to vector<64x16xf32>
    %45 = tpu.concatenate %28, %30, %32, %34, %36, %38, %40, %42, %44 in 1 : vector<64x16xf32>, vector<64x16xf32>, vector<64x16xf32>, vector<64x16xf32>, vector<64x16xf32>, vector<64x16xf32>, vector<64x16xf32>, vector<64x16xf32>, vector<64x16xf32> -> vector<64x144xf32>
    %46 = vector.extract_strided_slice %5 {offsets = [144, 0], sizes = [144, 128], strides = [1, 1]} : vector<288x128xf32> to vector<144x128xf32>
    %cst_4 = arith.constant dense<0.000000e+00> : vector<64x128xf32>
    %47 = tpu.matmul %45, %46, %cst_4 {dimension_numbers = #tpu.dot_dimension_numbers<[1], [0], [0], [1], [0, 0, 1, 1], [], []>} : vector<64x144xf32>, vector<144x128xf32>, vector<64x128xf32> -> vector<64x128xf32>
    %48 = arith.addf %26, %47 : vector<64x128xf32>
    %49 = vector.shape_cast %48 : vector<64x128xf32> to vector<4x16x128xf32>
    %c0_5 = arith.constant 0 : index
    %c0_6 = arith.constant 0 : index
    %c0_7 = arith.constant 0 : index
    %c0_8 = arith.constant 0 : index
    %50 = vector.load %arg4[%c0_5, %c0_6, %c0_7, %c0_8] : memref<1x4x16x128xf32, #tpu.memory_space<vmem>>, vector<1x4x16x128xf32>
    %51 = vector.shape_cast %50 : vector<1x4x16x128xf32> to vector<4x16x128xf32>
    %52 = vector.shape_cast %49 : vector<4x16x128xf32> to vector<1x4x16x128xf32>
    tpu.vector_store %arg4[%c0_5, %c0_6, %c0_7, %c0_8], %52 {strides = array<i32>} : memref<1x4x16x128xf32, #tpu.memory_space<vmem>>, vector<1x4x16x128xf32>,
    return
  }
  func.func @transform_0(%arg0: i32, %arg1: i32) -> (i32, i32, i32, i32) {
    %c0_i32 = arith.constant 0 : i32
    %c0_i32_0 = arith.constant 0 : i32
    %c0_i32_1 = arith.constant 0 : i32
    %c0_i32_2 = arith.constant 0 : i32
    return %arg0, %c0_i32, %c0_i32_0, %c0_i32_1 : i32, i32, i32, i32
  }
  func.func @transform_1(%arg0: i32, %arg1: i32) -> (i32, i32) {
    %c0_i32 = arith.constant 0 : i32
    %c0_i32_0 = arith.constant 0 : i32
    %c0_i32_1 = arith.constant 0 : i32
    return %c0_i32, %c0_i32_0 : i32, i32
  }
  func.func @transform_2(%arg0: i32, %arg1: i32) -> (i32, i32, i32, i32) {
    %c0_i32 = arith.constant 0 : i32
    %c0_i32_0 = arith.constant 0 : i32
    %c0_i32_1 = arith.constant 0 : i32
    return %arg0, %arg1, %c0_i32, %c0_i32_0 : i32, i32, i32, i32
  }
}

</mosaic_0001>

<llo_original>
// kernel: psconv2d_pallas.1
$region0: #{psconv2d_pallas.1}
  #allocation0 [shape = 'u32[]', space=smem, size = 0x4, offset = 0x4, fixed_abs, tag = 'smem constant byte address 0x4 - core index']
  #allocation1 [shape = 'u32[144,128]{1,0:T(1,128)}', space=vmem, size = 0x12000, scoped, tag = 'internal scratch']
  %s0 = inlined_call_operand.vmem [shape: f32[2,20,20,16], index: 0, kind: input, shape index: {}]
  %s1 = inlined_call_operand.vmem [shape: f32[288,128], index: 1, kind: input, shape index: {}]
  %s2 = inlined_call_operand.vmem [shape: f32[2,16,16,128], index: 2, kind: output, shape index: {}]
  %s3 = sld [smem:[#allocation0]]
  $region41: #{psconv2d_pallas.1} parent=0
    _
  %s5 = ssub.s32 1, %s3
  %s6 = scalar_select 0, %s5, %s3
  loop: start=0, step=1, limit=10
  $region2: #{psconv2d_pallas.1} parent=0 // loop_pre_header
    _
  $region3: #{psconv2d_pallas.1} parent=0 // loop_header
    %s8 = sphi 0, %s12
    %p9 = scmp.ge.s32.totalorder %s8, 10
    %s15 = sphi 0, %s27
    %s16 = sphi 0, %s23
    %s17 = sphi 0, %s15
    %s18 = sphi 0, %s16
    %s19 = sphi 0, %s17
    %s20 = sphi 0, %s18
    %s30 = sphi 0, %s32
    %s33 = sphi 0, %s30
    %s34 = sphi 0, %s33
    %s50 = sphi 0, %s34
    %s54 = sphi 0, %s54
    %s56 = sphi 0, %s54
    %s57 = sphi 0, %s56
    %s71 = sphi 0, %s57
    %s79 = sphi 0, %s81
    %s82 = sphi 0, %s79
    %s83 = sphi 0, %s82
    %s99 = sphi 0, %s83
  $region4: #{psconv2d_pallas.1} parent=0 // loop_header_branch
    %11 = sbr.rel (%p9) target = $region8
  $region5: #{psconv2d_pallas.1} parent=0 // loop_body
    %s13 = ssub.s32 %s8, 1
    %s14 = ssub.s32 %s8, 2
    %s21 = sadd.s32 1, %s16
    %p22 = scmp.ge.s32.totalorder %s21, 4
    %s23 = scalar_select %p22, 0, %s21
    %s24 = sadd.s32 1, %s15
    %s25 = scalar_select %p22, %s24, %s15
    %p26 = scmp.ge.s32.totalorder %s25, 2
    %s27 = scalar_select %p26, 0, %s25
    %s28 = ssub.s32 %s15, %s27
    %p29 = scmp.eq.s32.totalorder %s28, 0
    %s31 = sadd.s32 %s30, 1
    %s32 = scalar_select %p29, %s30, %s31
    %p35 = pneg %p29
    %p36 = scmp.eq.s32.totalorder %s8, 7
    %p37 = por %p35, %p36
    %p38 = scmp.ne.s32.totalorder %s30, %s33
    %p39 = scmp.eq.s32.totalorder %s8, 0
    %p40 = por %p38, %p39
    %p41 = scmp.ne.s32.totalorder %s30, %s33
    %p42 = scmp.eq.s32.totalorder %s13, 7
    %p43 = por %p41, %p42
    %p44 = scmp.ne.s32.totalorder %s33, %s34
    %p45 = scmp.eq.s32.totalorder %s13, 0
    %p46 = por %p44, %p45
    %p47 = scmp.ne.s32.totalorder %s33, %s34
    %p48 = scmp.eq.s32.totalorder %s14, 7
    %p49 = por %p47, %p48
    %p51 = scmp.ne.s32.totalorder %s34, %s50
    %p52 = scmp.eq.s32.totalorder %s14, 0
    %p53 = por %p51, %p52
    %s55 = sadd.s32 %s54, 1
    %p58 = scmp.eq.s32.totalorder %s8, 7
    %p59 = scmp.ne.s32.totalorder %s54, %s56
    %p60 = scmp.eq.s32.totalorder %s8, 0
    %p61 = por %p59, %p60
    %p62 = scmp.ne.s32.totalorder %s54, %s56
    %p63 = scmp.eq.s32.totalorder %s13, 7
    %p64 = por %p62, %p63
    %p65 = scmp.ne.s32.totalorder %s56, %s57
    %p66 = scmp.eq.s32.totalorder %s13, 0
    %p67 = por %p65, %p66
    %p68 = scmp.ne.s32.totalorder %s56, %s57
    %p69 = scmp.eq.s32.totalorder %s14, 7
    %p70 = por %p68, %p69
    %p72 = scmp.ne.s32.totalorder %s57, %s71
    %p73 = scmp.eq.s32.totalorder %s14, 0
    %p74 = por %p72, %p73
    %s75 = ssub.s32 %s15, %s27
    %s76 = ssub.s32 %s16, %s23
    %s77 = sor.u32 %s75, %s76
    %p78 = scmp.eq.s32.totalorder %s77, 0
    %s80 = sadd.s32 %s79, 1
    %s81 = scalar_select %p78, %s79, %s80
    %p84 = pneg %p78
    %p85 = scmp.eq.s32.totalorder %s8, 7
    %p86 = por %p84, %p85
    %p87 = scmp.ne.s32.totalorder %s79, %s82
    %p88 = scmp.eq.s32.totalorder %s8, 0
    %p89 = por %p87, %p88
    %p90 = scmp.ne.s32.totalorder %s79, %s82
    %p91 = scmp.eq.s32.totalorder %s13, 7
    %p92 = por %p90, %p91
    %p93 = scmp.ne.s32.totalorder %s82, %s83
    %p94 = scmp.eq.s32.totalorder %s13, 0
    %p95 = por %p93, %p94
    %p96 = scmp.ne.s32.totalorder %s82, %s83
    %p97 = scmp.eq.s32.totalorder %s14, 7
    %p98 = por %p96, %p97
    %p100 = scmp.ne.s32.totalorder %s83, %s99
    %p101 = scmp.eq.s32.totalorder %s14, 0
    %p102 = por %p100, %p101
    %p103 = scmp.le.s32.totalorder 1, %s8
    %p104 = scmp.lt.s32.totalorder %s8, 9
    %p105 = pnand %p103, %p104
    %p106 = pneg %p105
    // Predicated region
    $region9: #{psconv2d_pallas.1} parent=5 // pred_check
      _
    $region10: #{psconv2d_pallas.1} parent=5 // pred_check_branch
      %108 = sbr.rel (%p105) target = $region12
    $region11: #{psconv2d_pallas.1} parent=5 // pred_region
      %s109 = ssub.s32 %s8, 1
      // Predicated region
      $region13: #{psconv2d_pallas.1} parent=11 // pred_check
        %p110 = pneg %p67
      $region14: #{psconv2d_pallas.1} parent=11 // pred_check_branch
        %112 = sbr.rel (%p110) target = $region16
      $region15: #{psconv2d_pallas.1} parent=11 // pred_region
        _
      $region16: #{psconv2d_pallas.1} parent=11 // pred_fallthru
        _
    $region12: #{psconv2d_pallas.1} parent=5 // pred_fallthru
      _
    %p113 = scmp.lt.s32.totalorder %s8, 8
    // Predicated region
    $region17: #{psconv2d_pallas.1} parent=5 // pred_check
      %p114 = pneg %p113
    $region18: #{psconv2d_pallas.1} parent=5 // pred_check_branch
      %116 = sbr.rel (%p114) target = $region20
    $region19: #{psconv2d_pallas.1} parent=5 // pred_region
      // Predicated region
      $region21: #{psconv2d_pallas.1} parent=19 // pred_check
        %p117 = pneg %p40
      $region22: #{psconv2d_pallas.1} parent=19 // pred_check_branch
        %119 = sbr.rel (%p117) target = $region24
      $region23: #{psconv2d_pallas.1} parent=19 // pred_region
        %p120 = scmp.lt.s32.totalorder %s15, 1
        %s121 = scalar_select %p120, %s15, 1
        %s122 = smul.addr %s121, 60
        %s123 = smul.addr %s122, 8
        %s124 = scalar_lea.vmem %s0, %s123
      $region24: #{psconv2d_pallas.1} parent=19 // pred_fallthru
        _
    $region20: #{psconv2d_pallas.1} parent=5 // pred_fallthru
      _
    %p125 = scmp.le.s32.totalorder 1, %s8
    %p126 = scmp.lt.s32.totalorder %s8, 9
    %p127 = pnand %p125, %p126
    %p128 = pneg %p127
    // Predicated region
    $region25: #{psconv2d_pallas.1} parent=5 // pred_check
      _
    $region26: #{psconv2d_pallas.1} parent=5 // pred_check_branch
      %130 = sbr.rel (%p127) target = $region28
    $region27: #{psconv2d_pallas.1} parent=5 // pred_region
      %s131 = ssub.s32 %s8, 1
      %p132 = scmp.lt.s32.totalorder %s17, 1
      %s133 = scalar_select %p132, %s17, 1
      %s134 = smul.addr %s133, 60
      %s135 = smul.addr %s134, 8
      %s136 = scalar_lea.vmem %s0, %s135
      %p137 = pneg %p46
      %p138 = pneg %p43
      %p139 = pneg %p67
      %p140 = pneg %p64
      %p141 = pneg %p95
      %p142 = pneg %p92
      %s143 = smul.u32 4, %s18
      %p144 = scmp.lt.s32.totalorder %s17, 1
      %s145 = scalar_select %p144, %s17, 1
      %p146 = scmp.lt.s32.totalorder %s143, 15
      %s147 = scalar_select %p146, %s143, 15
      %s148 = smul.addr %s147, 2
      %s149 = smul.addr %s145, 32
      %s150 = sadd.s32 %s148, %s149
      %s151 = smul.addr %s150, 8
      %s152 = scalar_lea.vmem %s2, %s151
      %p153 = scmp.lt.s32.totalorder %s17, 1
      %s154 = scalar_select %p153, %s17, 1
      %s155 = smul.addr %s154, 60
      %s156 = smul.addr %s155, 8
      %s157 = scalar_lea.vmem %s0, %s156
      %s158 = smul.u32 4, %s18
      %p159 = scmp.lt.s32.totalorder %s17, 1
      %s160 = scalar_select %p159, %s17, 1
      %p161 = scmp.lt.s32.totalorder %s158, 15
      %s162 = scalar_select %p161, %s158, 15
      %s163 = smul.addr %s162, 2
      %s164 = smul.addr %s160, 32
      %s165 = sadd.s32 %s163, %s164
      %s166 = smul.addr %s165, 8
      %s167 = scalar_lea.vmem %s2, %s166
      %s168 = smul.u32 4, %s18
      %s169 = smul.u32 %s18, 4
      %s170 = smul.u32 %s169, 24
      %s171 = scalar_lea.vmem %s157, %s170
      %v172 = vld [vmem:[%s171] sm:$0xff]
      %v173 = vld [vmem:[%s171 + $0x8] sm:$0xff]
      %v174 = vld [vmem:[%s171 + $0x10] sm:$0xf]
      %v175 = vld [vmem:[%s171 + $0x18] sm:$0xff]
      %v176 = vld [vmem:[%s171 + $0x20] sm:$0xff]
      %v177 = vld [vmem:[%s171 + $0x28] sm:$0xf]
      %v178 = vld [vmem:[%s171 + $0x30] sm:$0xff]
      %v179 = vld [vmem:[%s171 + $0x38] sm:$0xff]
      %v180 = vld [vmem:[%s171 + $0x40] sm:$0xf]
      %v181 = vld [vmem:[%s171 + $0x48] sm:$0xff]
      %v182 = vld [vmem:[%s171 + $0x50] sm:$0xff]
      %v183 = vld [vmem:[%s171 + $0x58] sm:$0xf]
      %v184 = vld [vmem:[%s171 + $0x60] sm:$0xff]
      %v185 = vld [vmem:[%s171 + $0x68] sm:$0xff]
      %v186 = vld [vmem:[%s171 + $0x70] sm:$0xf]
      %v187 = vld [vmem:[%s171 + $0x78] sm:$0xff]
      %v188 = vld [vmem:[%s171 + $0x80] sm:$0xff]
      %v189 = vld [vmem:[%s171 + $0x88] sm:$0xf]
      %v190 = vld [vmem:[%s171 + $0x90] sm:$0xff]
      %v191 = vld [vmem:[%s171 + $0x98] sm:$0xff]
      %v192 = vld [vmem:[%s171 + $0xa0] sm:$0xf]
      %v193 = vld [vmem:[%s171 + $0xa8] sm:$0xff]
      %v194 = vld [vmem:[%s171 + $0xb0] sm:$0xff]
      %v195 = vld [vmem:[%s171 + $0xb8] sm:$0xf]
      %v196 = vld [vmem:[%s1] sm:$0xff]
      %v197 = vld [vmem:[%s1 + $0x8] sm:$0xff]
      %v198 = vld [vmem:[%s1 + $0x10] sm:$0xff]
      %v199 = vld [vmem:[%s1 + $0x18] sm:$0xff]
      %v200 = vld [vmem:[%s1 + $0x20] sm:$0xff]
      %v201 = vld [vmem:[%s1 + $0x28] sm:$0xff]
      %v202 = vld [vmem:[%s1 + $0x30] sm:$0xff]
      %v203 = vld [vmem:[%s1 + $0x38] sm:$0xff]
      %v204 = vld [vmem:[%s1 + $0x40] sm:$0xff]
      %v205 = vld [vmem:[%s1 + $0x48] sm:$0xff]
      %v206 = vld [vmem:[%s1 + $0x50] sm:$0xff]
      %v207 = vld [vmem:[%s1 + $0x58] sm:$0xff]
      %v208 = vld [vmem:[%s1 + $0x60] sm:$0xff]
      %v209 = vld [vmem:[%s1 + $0x68] sm:$0xff]
      %v210 = vld [vmem:[%s1 + $0x70] sm:$0xff]
      %v211 = vld [vmem:[%s1 + $0x78] sm:$0xff]
      %v212 = vld [vmem:[%s1 + $0x80] sm:$0xff]
      %v213 = vld [vmem:[%s1 + $0x88] sm:$0xff]
      %v214 = vld [vmem:[%s1 + $0x90] sm:$0xff]
      %v215 = vld [vmem:[%s1 + $0x98] sm:$0xff]
      %v216 = vld [vmem:[%s1 + $0xa0] sm:$0xff]
      %v217 = vld [vmem:[%s1 + $0xa8] sm:$0xff]
      %v218 = vld [vmem:[%s1 + $0xb0] sm:$0xff]
      %v219 = vld [vmem:[%s1 + $0xb8] sm:$0xff]
      %v220 = vld [vmem:[%s1 + $0xc0] sm:$0xff]
      %v221 = vld [vmem:[%s1 + $0xc8] sm:$0xff]
      %v222 = vld [vmem:[%s1 + $0xd0] sm:$0xff]
      %v223 = vld [vmem:[%s1 + $0xd8] sm:$0xff]
      %v224 = vld [vmem:[%s1 + $0xe0] sm:$0xff]
      %v225 = vld [vmem:[%s1 + $0xe8] sm:$0xff]
      %v226 = vld [vmem:[%s1 + $0xf0] sm:$0xff]
      %v227 = vld [vmem:[%s1 + $0xf8] sm:$0xff]
      %v228 = vld [vmem:[%s1 + $0x100] sm:$0xff]
      %v229 = vld [vmem:[%s1 + $0x108] sm:$0xff]
      %v230 = vld [vmem:[%s1 + $0x110] sm:$0xff]
      %v231 = vld [vmem:[%s1 + $0x118] sm:$0xff]
      %vm244 = vcmask 1046528
      %v245 = vrot.slane %v175, 1
      %v246 = vrot.slane %v176, 1
      %v247 = vsel %vm244, %v245, %v246
      %v248 = vrot.slane %v177, 1
      %v249 = vsel %vm244, %v246, %v248
      %v250 = vrot.slane %v178, 1
      %v251 = vrot.slane %v179, 1
      %v252 = vsel %vm244, %v250, %v251
      %v253 = vrot.slane %v180, 1
      %v254 = vsel %vm244, %v251, %v253
      %v255 = vrot.slane %v181, 1
      %v256 = vrot.slane %v182, 1
      %v257 = vsel %vm244, %v255, %v256
      %v258 = vrot.slane %v183, 1
      %v259 = vsel %vm244, %v256, %v258
      %v260 = vrot.slane %v184, 1
      %v261 = vrot.slane %v185, 1
      %v262 = vsel %vm244, %v260, %v261
      %v263 = vrot.slane %v186, 1
      %v264 = vsel %vm244, %v261, %v263
      %vm273 = vcmask 1045504
      %v274 = vrot.slane %v175, 2
      %v275 = vrot.slane %v176, 2
      %v276 = vsel %vm273, %v274, %v275
      %v277 = vrot.slane %v177, 2
      %v278 = vsel %vm273, %v275, %v277
      %v279 = vrot.slane %v178, 2
      %v280 = vrot.slane %v179, 2
      %v281 = vsel %vm273, %v279, %v280
      %v282 = vrot.slane %v180, 2
      %v283 = vsel %vm273, %v280, %v282
      %v284 = vrot.slane %v181, 2
      %v285 = vrot.slane %v182, 2
      %v286 = vsel %vm273, %v284, %v285
      %v287 = vrot.slane %v183, 2
      %v288 = vsel %vm273, %v285, %v287
      %v289 = vrot.slane %v184, 2
      %v290 = vrot.slane %v185, 2
      %v291 = vsel %vm273, %v289, %v290
      %v292 = vrot.slane %v186, 2
      %v293 = vsel %vm273, %v290, %v292
      %vm294 = vcmask 1044480
      %v295 = vrot.slane %v175, 3
      %v296 = vrot.slane %v176, 3
      %v297 = vsel %vm294, %v295, %v296
      %v298 = vrot.slane %v177, 3
      %v299 = vsel %vm294, %v296, %v298
      %v300 = vrot.slane %v178, 3
      %v301 = vrot.slane %v179, 3
      %v302 = vsel %vm294, %v300, %v301
      %v303 = vrot.slane %v180, 3
      %v304 = vsel %vm294, %v301, %v303
      %v305 = vrot.slane %v181, 3
      %v306 = vrot.slane %v182, 3
      %v307 = vsel %vm294, %v305, %v306
      %v308 = vrot.slane %v183, 3
      %v309 = vsel %vm294, %v306, %v308
      %v310 = vrot.slane %v184, 3
      %v311 = vrot.slane %v185, 3
      %v312 = vsel %vm294, %v310, %v311
      %v313 = vrot.slane %v186, 3
      %v314 = vsel %vm294, %v311, %v313
      %v318 = vrot.slane %v187, 1
      %v319 = vrot.slane %v188, 1
      %v320 = vsel %vm244, %v318, %v319
      %v321 = vrot.slane %v189, 1
      %v322 = vsel %vm244, %v319, %v321
      %v323 = vrot.slane %v187, 2
      %v324 = vrot.slane %v188, 2
      %v325 = vsel %vm273, %v323, %v324
      %v326 = vrot.slane %v189, 2
      %v327 = vsel %vm273, %v324, %v326
      %v328 = vrot.slane %v187, 3
      %v329 = vrot.slane %v188, 3
      %v330 = vsel %vm294, %v328, %v329
      %v331 = vrot.slane %v189, 3
      %v332 = vsel %vm294, %v329, %v331
      %v336 = vrot.slane %v190, 1
      %v337 = vrot.slane %v191, 1
      %v338 = vsel %vm244, %v336, %v337
      %v339 = vrot.slane %v192, 1
      %v340 = vsel %vm244, %v337, %v339
      %v341 = vrot.slane %v190, 2
      %v342 = vrot.slane %v191, 2
      %v343 = vsel %vm273, %v341, %v342
      %v344 = vrot.slane %v192, 2
      %v345 = vsel %vm273, %v342, %v344
      %v346 = vrot.slane %v190, 3
      %v347 = vrot.slane %v191, 3
      %v348 = vsel %vm294, %v346, %v347
      %v349 = vrot.slane %v192, 3
      %v350 = vsel %vm294, %v347, %v349
      %351 = vrot.lane.b32.xlu0 %v276, 16
      %v352 = vpop.permute.xlu0 %351
      %353 = vrot.lane.b32.xlu0 %v278, 16
      %v354 = vpop.permute.xlu0 %353
      %355 = vrot.lane.b32.xlu0 %v281, 16
      %v356 = vpop.permute.xlu0 %355
      %357 = vrot.lane.b32.xlu0 %v283, 16
      %v358 = vpop.permute.xlu0 %357
      %359 = vrot.lane.b32.xlu0 %v286, 16
      %v360 = vpop.permute.xlu0 %359
      %361 = vrot.lane.b32.xlu0 %v288, 16
      %v362 = vpop.permute.xlu0 %361
      %363 = vrot.lane.b32.xlu0 %v291, 16
      %v364 = vpop.permute.xlu0 %363
      %365 = vrot.lane.b32.xlu0 %v293, 16
      %v366 = vpop.permute.xlu0 %365
      %375 = vrot.lane.b32.xlu0 %v297, 32
      %v376 = vpop.permute.xlu0 %375
      %377 = vrot.lane.b32.xlu0 %v299, 32
      %v378 = vpop.permute.xlu0 %377
      %379 = vrot.lane.b32.xlu0 %v302, 32
      %v380 = vpop.permute.xlu0 %379
      %381 = vrot.lane.b32.xlu0 %v304, 32
      %v382 = vpop.permute.xlu0 %381
      %383 = vrot.lane.b32.xlu0 %v307, 32
      %v384 = vpop.permute.xlu0 %383
      %385 = vrot.lane.b32.xlu0 %v309, 32
      %v386 = vpop.permute.xlu0 %385
      %387 = vrot.lane.b32.xlu0 %v312, 32
      %v388 = vpop.permute.xlu0 %387
      %389 = vrot.lane.b32.xlu0 %v314, 32
      %v390 = vpop.permute.xlu0 %389
      %399 = vrot.lane.b32.xlu0 %v252, 48
      %v400 = vpop.permute.xlu0 %399
      %401 = vrot.lane.b32.xlu0 %v254, 48
      %v402 = vpop.permute.xlu0 %401
      %403 = vrot.lane.b32.xlu0 %v257, 48
      %v404 = vpop.permute.xlu0 %403
      %405 = vrot.lane.b32.xlu0 %v259, 48
      %v406 = vpop.permute.xlu0 %405
      %407 = vrot.lane.b32.xlu0 %v262, 48
      %v408 = vpop.permute.xlu0 %407
      %409 = vrot.lane.b32.xlu0 %v264, 48
      %v410 = vpop.permute.xlu0 %409
      %411 = vrot.lane.b32.xlu0 %v320, 48
      %v412 = vpop.permute.xlu0 %411
      %413 = vrot.lane.b32.xlu0 %v322, 48
      %v414 = vpop.permute.xlu0 %413
      %423 = vrot.lane.b32.xlu0 %v281, 64
      %v424 = vpop.permute.xlu0 %423
      %425 = vrot.lane.b32.xlu0 %v283, 64
      %v426 = vpop.permute.xlu0 %425
      %427 = vrot.lane.b32.xlu0 %v286, 64
      %v428 = vpop.permute.xlu0 %427
      %429 = vrot.lane.b32.xlu0 %v288, 64
      %v430 = vpop.permute.xlu0 %429
      %431 = vrot.lane.b32.xlu0 %v291, 64
      %v432 = vpop.permute.xlu0 %431
      %433 = vrot.lane.b32.xlu0 %v293, 64
      %v434 = vpop.permute.xlu0 %433
      %435 = vrot.lane.b32.xlu0 %v325, 64
      %v436 = vpop.permute.xlu0 %435
      %437 = vrot.lane.b32.xlu0 %v327, 64
      %v438 = vpop.permute.xlu0 %437
      %447 = vrot.lane.b32.xlu0 %v302, 80
      %v448 = vpop.permute.xlu0 %447
      %449 = vrot.lane.b32.xlu0 %v304, 80
      %v450 = vpop.permute.xlu0 %449
      %451 = vrot.lane.b32.xlu0 %v307, 80
      %v452 = vpop.permute.xlu0 %451
      %453 = vrot.lane.b32.xlu0 %v309, 80
      %v454 = vpop.permute.xlu0 %453
      %455 = vrot.lane.b32.xlu0 %v312, 80
      %v456 = vpop.permute.xlu0 %455
      %457 = vrot.lane.b32.xlu0 %v314, 80
      %v458 = vpop.permute.xlu0 %457
      %459 = vrot.lane.b32.xlu0 %v330, 80
      %v460 = vpop.permute.xlu0 %459
      %461 = vrot.lane.b32.xlu0 %v332, 80
      %v462 = vpop.permute.xlu0 %461
      %471 = vrot.lane.b32.xlu0 %v257, 96
      %v472 = vpop.permute.xlu0 %471
      %473 = vrot.lane.b32.xlu0 %v259, 96
      %v474 = vpop.permute.xlu0 %473
      %475 = vrot.lane.b32.xlu0 %v262, 96
      %v476 = vpop.permute.xlu0 %475
      %477 = vrot.lane.b32.xlu0 %v264, 96
      %v478 = vpop.permute.xlu0 %477
      %479 = vrot.lane.b32.xlu0 %v320, 96
      %v480 = vpop.permute.xlu0 %479
      %481 = vrot.lane.b32.xlu0 %v322, 96
      %v482 = vpop.permute.xlu0 %481
      %483 = vrot.lane.b32.xlu0 %v338, 96
      %v484 = vpop.permute.xlu0 %483
      %485 = vrot.lane.b32.xlu0 %v340, 96
      %v486 = vpop.permute.xlu0 %485
      %495 = vrot.lane.b32.xlu0 %v286, 112
      %v496 = vpop.permute.xlu0 %495
      %497 = vrot.lane.b32.xlu0 %v288, 112
      %v498 = vpop.permute.xlu0 %497
      %499 = vrot.lane.b32.xlu0 %v291, 112
      %v500 = vpop.permute.xlu0 %499
      %501 = vrot.lane.b32.xlu0 %v293, 112
      %v502 = vpop.permute.xlu0 %501
      %503 = vrot.lane.b32.xlu0 %v325, 112
      %v504 = vpop.permute.xlu0 %503
      %505 = vrot.lane.b32.xlu0 %v327, 112
      %v506 = vpop.permute.xlu0 %505
      %507 = vrot.lane.b32.xlu0 %v343, 112
      %v508 = vpop.permute.xlu0 %507
      %509 = vrot.lane.b32.xlu0 %v345, 112
      %v510 = vpop.permute.xlu0 %509
      %vm519 = vcmask 130048
      %v520 = vsel %vm519, %v247, %v352
      %v521 = vsel %vm519, %v249, %v354
      %v522 = vsel %vm519, %v252, %v356
      %v523 = vsel %vm519, %v254, %v358
      %v524 = vsel %vm519, %v257, %v360
      %v525 = vsel %vm519, %v259, %v362
      %v526 = vsel %vm519, %v262, %v364
      %v527 = vsel %vm519, %v264, %v366
      %vm528 = vcmask 261120
      %v529 = vsel %vm528, %v520, %v376
      %v530 = vsel %vm528, %v521, %v378
      %v531 = vsel %vm528, %v522, %v380
      %v532 = vsel %vm528, %v523, %v382
      %v533 = vsel %vm528, %v524, %v384
      %v534 = vsel %vm528, %v525, %v386
      %v535 = vsel %vm528, %v526, %v388
      %v536 = vsel %vm528, %v527, %v390
      %vm537 = vcmask 392192
      %v538 = vsel %vm537, %v529, %v400
      %v539 = vsel %vm537, %v530, %v402
      %v540 = vsel %vm537, %v531, %v404
      %v541 = vsel %vm537, %v532, %v406
      %v542 = vsel %vm537, %v533, %v408
      %v543 = vsel %vm537, %v534, %v410
      %v544 = vsel %vm537, %v535, %v412
      %v545 = vsel %vm537, %v536, %v414
      %vm546 = vcmask 523264
      %v547 = vsel %vm546, %v538, %v424
      %v548 = vsel %vm546, %v539, %v426
      %v549 = vsel %vm546, %v540, %v428
      %v550 = vsel %vm546, %v541, %v430
      %v551 = vsel %vm546, %v542, %v432
      %v552 = vsel %vm546, %v543, %v434
      %v553 = vsel %vm546, %v544, %v436
      %v554 = vsel %vm546, %v545, %v438
      %vm555 = vcmask 654336
      %v556 = vsel %vm555, %v547, %v448
      %v557 = vsel %vm555, %v548, %v450
      %v558 = vsel %vm555, %v549, %v452
      %v559 = vsel %vm555, %v550, %v454
      %v560 = vsel %vm555, %v551, %v456
      %v561 = vsel %vm555, %v552, %v458
      %v562 = vsel %vm555, %v553, %v460
      %v563 = vsel %vm555, %v554, %v462
      %vm564 = vcmask 785408
      %v565 = vsel %vm564, %v556, %v472
      %v566 = vsel %vm564, %v557, %v474
      %v567 = vsel %vm564, %v558, %v476
      %v568 = vsel %vm564, %v559, %v478
      %v569 = vsel %vm564, %v560, %v480
      %v570 = vsel %vm564, %v561, %v482
      %v571 = vsel %vm564, %v562, %v484
      %v572 = vsel %vm564, %v563, %v486
      %vm573 = vcmask 916480
      %v574 = vsel %vm573, %v565, %v496
      %v575 = vsel %vm573, %v566, %v498
      %v576 = vsel %vm573, %v567, %v500
      %v577 = vsel %vm573, %v568, %v502
      %v578 = vsel %vm573, %v569, %v504
      %v579 = vsel %vm573, %v570, %v506
      %v580 = vsel %vm573, %v571, %v508
      %v581 = vsel %vm573, %v572, %v510
      %v585 = vrot.slane %v172, 2
      %v586 = vrot.slane %v173, 2
      %v587 = vsel %vm273, %v585, %v586
      %v588 = vrot.slane %v174, 2
      %v589 = vsel %vm273, %v586, %v588
      %vm590 = vcmask 1043456
      %v591 = vrot.slane %v172, 4
      %v592 = vrot.slane %v173, 4
      %v593 = vsel %vm590, %v591, %v592
      %v594 = vrot.slane %v174, 4
      %v595 = vsel %vm590, %v592, %v594
      %v596 = vrot.slane %v175, 4
      %v597 = vrot.slane %v176, 4
      %v598 = vsel %vm590, %v596, %v597
      %v599 = vrot.slane %v177, 4
      %v600 = vsel %vm590, %v597, %v599
      %v601 = vrot.slane %v178, 4
      %v602 = vrot.slane %v179, 4
      %v603 = vsel %vm590, %v601, %v602
      %v604 = vrot.slane %v180, 4
      %v605 = vsel %vm590, %v602, %v604
      %v606 = vrot.slane %v181, 4
      %v607 = vrot.slane %v182, 4
      %v608 = vsel %vm590, %v606, %v607
      %v609 = vrot.slane %v183, 4
      %v610 = vsel %vm590, %v607, %v609
      %v611 = vrot.slane %v184, 4
      %v612 = vrot.slane %v185, 4
      %v613 = vsel %vm590, %v611, %v612
      %v614 = vrot.slane %v186, 4
      %v615 = vsel %vm590, %v612, %v614
      %v616 = vrot.slane %v187, 4
      %v617 = vrot.slane %v188, 4
      %v618 = vsel %vm590, %v616, %v617
      %v619 = vrot.slane %v189, 4
      %v620 = vsel %vm590, %v617, %v619
      %v624 = vrot.slane %v193, 2
      %v625 = vrot.slane %v194, 2
      %v626 = vsel %vm273, %v624, %v625
      %v627 = vrot.slane %v195, 2
      %v628 = vsel %vm273, %v625, %v627
      %v629 = vrot.slane %v190, 4
      %v630 = vrot.slane %v191, 4
      %v631 = vsel %vm590, %v629, %v630
      %v632 = vrot.slane %v192, 4
      %v633 = vsel %vm590, %v630, %v632
      %v634 = vrot.slane %v193, 4
      %v635 = vrot.slane %v194, 4
      %v636 = vsel %vm590, %v634, %v635
      %v637 = vrot.slane %v195, 4
      %v638 = vsel %vm590, %v635, %v637
      %639 = vrot.lane.b32.xlu0 %v587, 16
      %v640 = vpop.permute.xlu0 %639
      %641 = vrot.lane.b32.xlu0 %v589, 16
      %v642 = vpop.permute.xlu0 %641
      %645 = vrot.lane.b32.xlu0 %v593, 32
      %v646 = vpop.permute.xlu0 %645
      %647 = vrot.lane.b32.xlu0 %v595, 32
      %v648 = vpop.permute.xlu0 %647
      %649 = vrot.lane.b32.xlu0 %v598, 32
      %v650 = vpop.permute.xlu0 %649
      %651 = vrot.lane.b32.xlu0 %v600, 32
      %v652 = vpop.permute.xlu0 %651
      %653 = vrot.lane.b32.xlu0 %v603, 32
      %v654 = vpop.permute.xlu0 %653
      %655 = vrot.lane.b32.xlu0 %v605, 32
      %v656 = vpop.permute.xlu0 %655
      %657 = vrot.lane.b32.xlu0 %v608, 32
      %v658 = vpop.permute.xlu0 %657
      %659 = vrot.lane.b32.xlu0 %v610, 32
      %v660 = vpop.permute.xlu0 %659
      %669 = vrot.lane.b32.xlu0 %v178, 48
      %v670 = vpop.permute.xlu0 %669
      %671 = vrot.lane.b32.xlu0 %v179, 48
      %v672 = vpop.permute.xlu0 %671
      %673 = vrot.lane.b32.xlu0 %v181, 48
      %v674 = vpop.permute.xlu0 %673
      %675 = vrot.lane.b32.xlu0 %v182, 48
      %v676 = vpop.permute.xlu0 %675
      %677 = vrot.lane.b32.xlu0 %v184, 48
      %v678 = vpop.permute.xlu0 %677
      %679 = vrot.lane.b32.xlu0 %v185, 48
      %v680 = vpop.permute.xlu0 %679
      %681 = vrot.lane.b32.xlu0 %v187, 48
      %v682 = vpop.permute.xlu0 %681
      %683 = vrot.lane.b32.xlu0 %v188, 48
      %v684 = vpop.permute.xlu0 %683
      %693 = vrot.lane.b32.xlu0 %v603, 80
      %v694 = vpop.permute.xlu0 %693
      %695 = vrot.lane.b32.xlu0 %v605, 80
      %v696 = vpop.permute.xlu0 %695
      %697 = vrot.lane.b32.xlu0 %v608, 80
      %v698 = vpop.permute.xlu0 %697
      %699 = vrot.lane.b32.xlu0 %v610, 80
      %v700 = vpop.permute.xlu0 %699
      %701 = vrot.lane.b32.xlu0 %v613, 80
      %v702 = vpop.permute.xlu0 %701
      %703 = vrot.lane.b32.xlu0 %v615, 80
      %v704 = vpop.permute.xlu0 %703
      %705 = vrot.lane.b32.xlu0 %v618, 80
      %v706 = vpop.permute.xlu0 %705
      %707 = vrot.lane.b32.xlu0 %v620, 80
      %v708 = vpop.permute.xlu0 %707
      %717 = vrot.lane.b32.xlu0 %v184, 96
      %v718 = vpop.permute.xlu0 %717
      %719 = vrot.lane.b32.xlu0 %v185, 96
      %v720 = vpop.permute.xlu0 %719
      %721 = vrot.lane.b32.xlu0 %v187, 96
      %v722 = vpop.permute.xlu0 %721
      %723 = vrot.lane.b32.xlu0 %v188, 96
      %v724 = vpop.permute.xlu0 %723
      %725 = vrot.lane.b32.xlu0 %v190, 96
      %v726 = vpop.permute.xlu0 %725
      %727 = vrot.lane.b32.xlu0 %v191, 96
      %v728 = vpop.permute.xlu0 %727
      %729 = vrot.lane.b32.xlu0 %v193, 96
      %v730 = vpop.permute.xlu0 %729
      %731 = vrot.lane.b32.xlu0 %v194, 96
      %v732 = vpop.permute.xlu0 %731
      %741 = vrot.lane.b32.xlu0 %v626, 112
      %v742 = vpop.permute.xlu0 %741
      %743 = vrot.lane.b32.xlu0 %v628, 112
      %v744 = vpop.permute.xlu0 %743
      %v747 = vsel %vm519, %v172, %v640
      %v748 = vsel %vm519, %v173, %v642
      %v749 = vsel %vm519, %v175, %v352
      %v750 = vsel %vm519, %v176, %v354
      %v751 = vsel %vm519, %v178, %v356
      %v752 = vsel %vm519, %v179, %v358
      %v753 = vsel %vm519, %v181, %v360
      %v754 = vsel %vm519, %v182, %v362
      %v755 = vsel %vm528, %v747, %v646
      %v756 = vsel %vm528, %v748, %v648
      %v757 = vsel %vm528, %v749, %v650
      %v758 = vsel %vm528, %v750, %v652
      %v759 = vsel %vm528, %v751, %v654
      %v760 = vsel %vm528, %v752, %v656
      %v761 = vsel %vm528, %v753, %v658
      %v762 = vsel %vm528, %v754, %v660
      %v763 = vsel %vm537, %v755, %v670
      %v764 = vsel %vm537, %v756, %v672
      %v765 = vsel %vm537, %v757, %v674
      %v766 = vsel %vm537, %v758, %v676
      %v767 = vsel %vm537, %v759, %v678
      %v768 = vsel %vm537, %v760, %v680
      %v769 = vsel %vm537, %v761, %v682
      %v770 = vsel %vm537, %v762, %v684
      %v771 = vsel %vm546, %v763, %v424
      %v772 = vsel %vm546, %v764, %v426
      %v773 = vsel %vm546, %v765, %v428
      %v774 = vsel %vm546, %v766, %v430
      %v775 = vsel %vm546, %v767, %v432
      %v776 = vsel %vm546, %v768, %v434
      %v777 = vsel %vm546, %v769, %v436
      %v778 = vsel %vm546, %v770, %v438
      %v779 = vsel %vm555, %v771, %v694
      %v780 = vsel %vm555, %v772, %v696
      %v781 = vsel %vm555, %v773, %v698
      %v782 = vsel %vm555, %v774, %v700
      %v783 = vsel %vm555, %v775, %v702
      %v784 = vsel %vm555, %v776, %v704
      %v785 = vsel %vm555, %v777, %v706
      %v786 = vsel %vm555, %v778, %v708
      %v787 = vsel %vm564, %v779, %v718
      %v788 = vsel %vm564, %v780, %v720
      %v789 = vsel %vm564, %v781, %v722
      %v790 = vsel %vm564, %v782, %v724
      %v791 = vsel %vm564, %v783, %v726
      %v792 = vsel %vm564, %v784, %v728
      %v793 = vsel %vm564, %v785, %v730
      %v794 = vsel %vm564, %v786, %v732
      %v795 = vsel %vm573, %v787, %v500
      %v796 = vsel %vm573, %v788, %v502
      %v797 = vsel %vm573, %v789, %v504
      %v798 = vsel %vm573, %v790, %v506
      %v799 = vsel %vm573, %v791, %v508
      %v800 = vsel %vm573, %v792, %v510
      %v801 = vsel %vm573, %v793, %v742
      %v802 = vsel %vm573, %v794, %v744
      %v803 = vsel %vm519, %v613, 0
      %v805 = vsel %vm519, %v615, 0
      %v807 = vsel %vm519, %v618, 0
      %v809 = vsel %vm519, %v620, 0
      %v811 = vsel %vm519, %v631, 0
      %v813 = vsel %vm519, %v633, 0
      %v815 = vsel %vm519, %v636, 0
      %v817 = vsel %vm519, %v638, 0
      %819 = vmatprep.subr.mxu0 0.0
      %820 = vmatpush1.msra.mxu0 %v214
      %821 = vmatprep.subr.mxu0 0.0
      %822 = vmatpush1.msra.mxu0 %v215
      %823 = vmatprep.subr.mxu0 0.0
      %824 = vmatpush1.msra.mxu0 %v216
      %825 = vmatprep.subr.mxu0 0.0
      %826 = vmatpush1.msra.mxu0 %v217
      %827 = vmatprep.subr.mxu0 0.0
      %828 = vmatpush1.msra.mxu0 %v218
      %829 = vmatprep.subr.mxu0 0.0
      %830 = vmatpush1.msra.mxu0 %v219
      %831 = vmatprep.subr.mxu0 0.0
      %832 = vmatpush1.msra.mxu0 %v220
      %833 = vmatprep.subr.mxu0 0.0
      %834 = vmatpush1.msra.mxu0 %v221
      %835 = vmatprep.subr.mxu0 0.0
      %836 = vmatpush1.msra.mxu0 %v222
      %837 = vmatprep.subr.mxu0 0.0
      %838 = vmatpush1.msra.mxu0 %v223
      %839 = vmatprep.subr.mxu0 0.0
      %840 = vmatpush1.msra.mxu0 %v224
      %841 = vmatprep.subr.mxu0 0.0
      %842 = vmatpush1.msra.mxu0 %v225
      %843 = vmatprep.subr.mxu0 0.0
      %844 = vmatpush1.msra.mxu0 %v226
      %845 = vmatprep.subr.mxu0 0.0
      %846 = vmatpush1.msra.mxu0 %v227
      %847 = vmatprep.subr.mxu0 0.0
      %848 = vmatpush1.msra.mxu0 %v228
      %849 = vmatprep.subr.mxu0 0.0
      %850 = vmatpush1.msra.mxu0 %v229
      %851 = vmatprep.subr.mxu0 0.0
      %852 = vmatpush1.msra.mxu0 %v230
      %853 = vmatprep.subr.mxu0 0.0
      %854 = vmatpush1.msra.mxu0 %v231
      %855 = vmatprep.subr.mxu0 0.0
      %856 = vmatpush1.msra.mxu0 0.0
      %857 = vmatprep.subr.mxu0 0.0
      %858 = vmatpush1.msra.mxu0 0.0
      %859 = vmatprep.subr.mxu0 0.0
      %860 = vmatpush1.msra.mxu0 0.0
      %861 = vmatprep.subr.mxu0 0.0
      %862 = vmatpush1.msra.mxu0 0.0
      %863 = vmatprep.subr.mxu0 0.0
      %864 = vmatpush1.msra.mxu0 0.0
      %865 = vmatprep.subr.mxu0 0.0
      %866 = vmatpush1.msra.mxu0 0.0
      %867 = vmatprep.subr.mxu0 0.0
      %868 = vmatpush1.msra.mxu0 0.0
      %869 = vmatprep.subr.mxu0 0.0
      %870 = vmatpush1.msra.mxu0 0.0
      %871 = vmatprep.subr.mxu0 0.0
      %872 = vmatpush1.msra.mxu0 0.0
      %873 = vmatprep.subr.mxu0 0.0
      %874 = vmatpush1.msra.mxu0 0.0
      %875 = vmatprep.subr.mxu0 0.0
      %876 = vmatpush1.msra.mxu0 0.0
      %877 = vmatprep.subr.mxu0 0.0
      %878 = vmatpush1.msra.mxu0 0.0
      %879 = vmatprep.subr.mxu0 0.0
      %880 = vmatpush1.msra.mxu0 0.0
      %881 = vmatprep.subr.mxu0 0.0
      %882 = vmatpush1.msra.mxu0 0.0
      %883 = vmatprep.mubr.f32.mxu0 %v803
      %884 = vmatmul.mubr.f32.gmra.mrb[0].mxu0 %v795
      %v885 = vpop.f32.mrb[0].mxu0
      %v886 = vadd.f32 0.0, %v885
      %v887 = vpop.f32.mrb[0].mxu0
      %888 = vmatprep.mubr.f32.mxu0 %v805
      %889 = vmatmul.mubr.f32.gmra.mrb[0].mxu0 %v796
      %v890 = vpop.f32.mrb[0].mxu0
      %v891 = vadd.f32 0.0, %v890
      %v892 = vpop.f32.mrb[0].mxu0
      %893 = vmatprep.mubr.f32.mxu0 %v807
      %894 = vmatmul.mubr.f32.gmra.mrb[0].mxu0 %v797
      %v895 = vpop.f32.mrb[0].mxu0
      %v896 = vadd.f32 0.0, %v895
      %v897 = vpop.f32.mrb[0].mxu0
      %898 = vmatprep.mubr.f32.mxu0 %v809
      %899 = vmatmul.mubr.f32.gmra.mrb[0].mxu0 %v798
      %v900 = vpop.f32.mrb[0].mxu0
      %v901 = vadd.f32 0.0, %v900
      %v902 = vpop.f32.mrb[0].mxu0
      %903 = vmatprep.mubr.f32.mxu0 %v811
      %904 = vmatmul.mubr.f32.gmra.mrb[0].mxu0 %v799
      %v905 = vpop.f32.mrb[0].mxu0
      %v906 = vadd.f32 0.0, %v905
      %v907 = vpop.f32.mrb[0].mxu0
      %908 = vmatprep.mubr.f32.mxu0 %v813
      %909 = vmatmul.mubr.f32.gmra.mrb[0].mxu0 %v800
      %v910 = vpop.f32.mrb[0].mxu0
      %v911 = vadd.f32 0.0, %v910
      %v912 = vpop.f32.mrb[0].mxu0
      %913 = vmatprep.mubr.f32.mxu0 %v815
      %914 = vmatmul.mubr.f32.gmra.mrb[0].mxu0 %v801
      %v915 = vpop.f32.mrb[0].mxu0
      %v916 = vadd.f32 0.0, %v915
      %v917 = vpop.f32.mrb[0].mxu0
      %918 = vmatprep.mubr.f32.mxu0 %v817
      %919 = vmatmul.mubr.f32.gmra.mrb[0].mxu0 %v802
      %v920 = vpop.f32.mrb[0].mxu0
      %v921 = vadd.f32 0.0, %v920
      %v922 = vpop.f32.mrb[0].mxu0
      %923 = vdwg.mxu0
      %v924 = vsel %vm519, %v307, 0
      %v926 = vsel %vm519, %v309, 0
      %v928 = vsel %vm519, %v312, 0
      %v930 = vsel %vm519, %v314, 0
      %v932 = vsel %vm519, %v330, 0
      %v934 = vsel %vm519, %v332, 0
      %v936 = vsel %vm519, %v348, 0
      %v938 = vsel %vm519, %v350, 0
      %940 = vmatprep.subr.mxu0 0.0
      %941 = vmatpush1.msra.mxu0 %v196
      %942 = vmatprep.subr.mxu0 0.0
      %943 = vmatpush1.msra.mxu0 %v197
      %944 = vmatprep.subr.mxu0 0.0
      %945 = vmatpush1.msra.mxu0 %v198
      %946 = vmatprep.subr.mxu0 0.0
      %947 = vmatpush1.msra.mxu0 %v199
      %948 = vmatprep.subr.mxu0 0.0
      %949 = vmatpush1.msra.mxu0 %v200
      %950 = vmatprep.subr.mxu0 0.0
      %951 = vmatpush1.msra.mxu0 %v201
      %952 = vmatprep.subr.mxu0 0.0
      %953 = vmatpush1.msra.mxu0 %v202
      %954 = vmatprep.subr.mxu0 0.0
      %955 = vmatpush1.msra.mxu0 %v203
      %956 = vmatprep.subr.mxu0 0.0
      %957 = vmatpush1.msra.mxu0 %v204
      %958 = vmatprep.subr.mxu0 0.0
      %959 = vmatpush1.msra.mxu0 %v205
      %960 = vmatprep.subr.mxu0 0.0
      %961 = vmatpush1.msra.mxu0 %v206
      %962 = vmatprep.subr.mxu0 0.0
      %963 = vmatpush1.msra.mxu0 %v207
      %964 = vmatprep.subr.mxu0 0.0
      %965 = vmatpush1.msra.mxu0 %v208
      %966 = vmatprep.subr.mxu0 0.0
      %967 = vmatpush1.msra.mxu0 %v209
      %968 = vmatprep.subr.mxu0 0.0
      %969 = vmatpush1.msra.mxu0 %v210
      %970 = vmatprep.subr.mxu0 0.0
      %971 = vmatpush1.msra.mxu0 %v211
      %972 = vmatprep.subr.mxu0 0.0
      %973 = vmatpush1.msra.mxu0 %v212
      %974 = vmatprep.subr.mxu0 0.0
      %975 = vmatpush1.msra.mxu0 %v213
      %976 = vmatprep.subr.mxu0 0.0
      %977 = vmatpush1.msra.mxu0 0.0
      %978 = vmatprep.subr.mxu0 0.0
      %979 = vmatpush1.msra.mxu0 0.0
      %980 = vmatprep.subr.mxu0 0.0
      %981 = vmatpush1.msra.mxu0 0.0
      %982 = vmatprep.subr.mxu0 0.0
      %983 = vmatpush1.msra.mxu0 0.0
      %984 = vmatprep.subr.mxu0 0.0
      %985 = vmatpush1.msra.mxu0 0.0
      %986 = vmatprep.subr.mxu0 0.0
      %987 = vmatpush1.msra.mxu0 0.0
      %988 = vmatprep.subr.mxu0 0.0
      %989 = vmatpush1.msra.mxu0 0.0
      %990 = vmatprep.subr.mxu0 0.0
      %991 = vmatpush1.msra.mxu0 0.0
      %992 = vmatprep.subr.mxu0 0.0
      %993 = vmatpush1.msra.mxu0 0.0
      %994 = vmatprep.subr.mxu0 0.0
      %995 = vmatpush1.msra.mxu0 0.0
      %996 = vmatprep.subr.mxu0 0.0
      %997 = vmatpush1.msra.mxu0 0.0
      %998 = vmatprep.subr.mxu0 0.0
      %999 = vmatpush1.msra.mxu0 0.0
      %1000 = vmatprep.subr.mxu0 0.0
      %1001 = vmatpush1.msra.mxu0 0.0
      %1002 = vmatprep.subr.mxu0 0.0
      %1003 = vmatpush1.msra.mxu0 0.0
      %1004 = vmatprep.mubr.f32.mxu0 %v924
      %1005 = vmatmul.mubr.f32.gmra.mrb[0].mxu0 %v574
      %v1006 = vpop.f32.mrb[0].mxu0
      %v1007 = vadd.f32 %v886, %v1006
      %v1008 = vpop.f32.mrb[0].mxu0
      %1009 = vmatprep.mubr.f32.mxu0 %v926
      %1010 = vmatmul.mubr.f32.gmra.mrb[0].mxu0 %v575
      %v1011 = vpop.f32.mrb[0].mxu0
      %v1012 = vadd.f32 %v891, %v1011
      %v1013 = vpop.f32.mrb[0].mxu0
      %1014 = vmatprep.mubr.f32.mxu0 %v928
      %1015 = vmatmul.mubr.f32.gmra.mrb[0].mxu0 %v576
      %v1016 = vpop.f32.mrb[0].mxu0
      %v1017 = vadd.f32 %v896, %v1016
      %v1018 = vpop.f32.mrb[0].mxu0
      %1019 = vmatprep.mubr.f32.mxu0 %v930
      %1020 = vmatmul.mubr.f32.gmra.mrb[0].mxu0 %v577
      %v1021 = vpop.f32.mrb[0].mxu0
      %v1022 = vadd.f32 %v901, %v1021
      %v1023 = vpop.f32.mrb[0].mxu0
      %1024 = vmatprep.mubr.f32.mxu0 %v932
      %1025 = vmatmul.mubr.f32.gmra.mrb[0].mxu0 %v578
      %v1026 = vpop.f32.mrb[0].mxu0
      %v1027 = vadd.f32 %v906, %v1026
      %v1028 = vpop.f32.mrb[0].mxu0
      %1029 = vmatprep.mubr.f32.mxu0 %v934
      %1030 = vmatmul.mubr.f32.gmra.mrb[0].mxu0 %v579
      %v1031 = vpop.f32.mrb[0].mxu0
      %v1032 = vadd.f32 %v911, %v1031
      %v1033 = vpop.f32.mrb[0].mxu0
      %1034 = vmatprep.mubr.f32.mxu0 %v936
      %1035 = vmatmul.mubr.f32.gmra.mrb[0].mxu0 %v580
      %v1036 = vpop.f32.mrb[0].mxu0
      %v1037 = vadd.f32 %v916, %v1036
      %v1038 = vpop.f32.mrb[0].mxu0
      %1039 = vmatprep.mubr.f32.mxu0 %v938
      %1040 = vmatmul.mubr.f32.gmra.mrb[0].mxu0 %v581
      %v1041 = vpop.f32.mrb[0].mxu0
      %v1042 = vadd.f32 %v921, %v1041
      %v1043 = vpop.f32.mrb[0].mxu0
      %1044 = vdwg.mxu0
      %1045 = vst [vmem:[%s167] sm:$0xff] %v1007
      %1046 = vst [vmem:[%s167 + $0x8] sm:$0xff] %v1012
      %1047 = vst [vmem:[%s167 + $0x10] sm:$0xff] %v1017
      %1048 = vst [vmem:[%s167 + $0x18] sm:$0xff] %v1022
      %1049 = vst [vmem:[%s167 + $0x20] sm:$0xff] %v1027
      %1050 = vst [vmem:[%s167 + $0x28] sm:$0xff] %v1032
      %1051 = vst [vmem:[%s167 + $0x30] sm:$0xff] %v1037
      %1052 = vst [vmem:[%s167 + $0x38] sm:$0xff] %v1042
      %s1053 = smul.u32 4, %s18
      %p1054 = scmp.lt.s32.totalorder %s17, 1
      %s1055 = scalar_select %p1054, %s17, 1
      %p1056 = scmp.lt.s32.totalorder %s1053, 15
      %s1057 = scalar_select %p1056, %s1053, 15
      %s1058 = smul.addr %s1057, 2
      %s1059 = smul.addr %s1055, 32
      %s1060 = sadd.s32 %s1058, %s1059
      %s1061 = smul.addr %s1060, 8
      %s1062 = scalar_lea.vmem %s2, %s1061
      // Predicated region
      $region29: #{psconv2d_pallas.1} parent=27 // pred_check
        %p1063 = pneg %p92
      $region30: #{psconv2d_pallas.1} parent=27 // pred_check_branch
        %1065 = sbr.rel (%p1063) target = $region32
      $region31: #{psconv2d_pallas.1} parent=27 // pred_region
        %s1066 = smul.u32 4, %s18
      $region32: #{psconv2d_pallas.1} parent=27 // pred_fallthru
        _
    $region28: #{psconv2d_pallas.1} parent=5 // pred_fallthru
      _
    %p1067 = scmp.le.s32.totalorder 2, %s8
    // Predicated region
    $region33: #{psconv2d_pallas.1} parent=5 // pred_check
      %p1068 = pneg %p1067
    $region34: #{psconv2d_pallas.1} parent=5 // pred_check_branch
      %1070 = sbr.rel (%p1068) target = $region36
    $region35: #{psconv2d_pallas.1} parent=5 // pred_region
      %s1071 = ssub.s32 %s8, 2
      // Predicated region
      $region37: #{psconv2d_pallas.1} parent=35 // pred_check
        %p1072 = pneg %p98
      $region38: #{psconv2d_pallas.1} parent=35 // pred_check_branch
        %1074 = sbr.rel (%p1072) target = $region40
      $region39: #{psconv2d_pallas.1} parent=35 // pred_region
        %s1075 = smul.u32 4, %s20
        %p1076 = scmp.lt.s32.totalorder %s19, 1
        %s1077 = scalar_select %p1076, %s19, 1
        %p1078 = scmp.lt.s32.totalorder %s1075, 15
        %s1079 = scalar_select %p1078, %s1075, 15
        %s1080 = smul.addr %s1079, 2
        %s1081 = smul.addr %s1077, 32
        %s1082 = sadd.s32 %s1080, %s1081
        %s1083 = smul.addr %s1082, 8
        %s1084 = scalar_lea.vmem %s2, %s1083
      $region40: #{psconv2d_pallas.1} parent=35 // pred_fallthru
        _
    $region36: #{psconv2d_pallas.1} parent=5 // pred_fallthru
      _
  $region6: #{psconv2d_pallas.1} parent=0 // loop_footer
    %s12 = sadd.s32 1, %s8
  $region7: #{psconv2d_pallas.1} parent=0 // loop_footer_branch
    %7 = sbr.rel target = $region3
  $region8: #{psconv2d_pallas.1} parent=0 // loop_exit
    _

</llo_original>
